<compile_context>
chip_gen: v6e
topology: v6e:2x2x1
jax: 0.10.0
libtpu: 0.0.40
codegen_flags: <defaults>
</compile_context>

<pallas_src>
import jax
import jax.numpy as jnp
from jax.experimental import pallas as pl
from jax.experimental.pallas import tpu as pltpu


def _lstm_kernel(xh_ref, c_ref, w_gates_ref, b_gates_ref, w_out_ref, b_out_ref,
                 out_ref, h_out_ref, c_out_ref):
    H = c_ref.shape[-1]
    c = c_ref[...]                                      # (TB, H)  f32

    # Single fused gate matmul (K = I + H) on the MXU, f32 accumulation.
    gates = (jnp.dot(xh_ref[...].astype(jnp.bfloat16), w_gates_ref[...],
                     preferred_element_type=jnp.float32)
             + b_gates_ref[...])                        # (TB, 4H) f32; i/f/o lanes are z/2

    # One EUP tanh pass over the whole tile; recover sigmoid on the i/f/o lanes with
    # cheap VPU FMAs (sigmoid(z) = 0.5*tanh(z/2) + 0.5, z/2 already baked into weights).
    t = jnp.tanh(gates)
    lane = jax.lax.broadcasted_iota(jnp.int32, gates.shape, 1)
    is_g = (lane >= 2 * H) & (lane < 3 * H)
    acts = jnp.where(is_g, t, 0.5 * t + 0.5)

    i_g = acts[:, 0 * H:1 * H]
    f_g = acts[:, 1 * H:2 * H]
    g_g = acts[:, 2 * H:3 * H]
    o_g = acts[:, 3 * H:4 * H]

    c_new = f_g * c + i_g * g_g
    h_new = o_g * jnp.tanh(c_new)

    # Output projection.  concat([h', h', c']) @ W_o2o.T == h' @ (W1+W2) + c' @ W3,
    # with [(W1+W2) ; W3] pre-stacked row-wise into w_out_ref (2H, Op).
    h_bf = h_new.astype(jnp.bfloat16)
    c_bf = c_new.astype(jnp.bfloat16)
    if H % 128 == 0:
        # Lane-aligned H: concat is a free layout op -> single MXU matmul.
        hc = jnp.concatenate([h_bf, c_bf], axis=1)
        logits = jnp.dot(hc, w_out_ref[...], preferred_element_type=jnp.float32)
    else:
        # Small H: avoid a cross-lane relayout; slice the stacked weight instead.
        logits = (jnp.dot(h_bf, w_out_ref[:H, :], preferred_element_type=jnp.float32)
                  + jnp.dot(c_bf, w_out_ref[H:, :], preferred_element_type=jnp.float32))
    logits = logits + b_out_ref[...]                    # (TB, Op) f32; padded lanes ~ -1e30

    # Dropout (eval mode) == identity.

    # LogSoftmax over the lane axis; padded lanes contribute exp(-huge) == 0.
    m = jnp.max(logits, axis=1, keepdims=True)
    shifted = logits - m
    lse = jnp.log(jnp.sum(jnp.exp(shifted), axis=1, keepdims=True))
    out_ref[...] = (shifted - lse).astype(out_ref.dtype)

    h_out_ref[...] = h_new.astype(h_out_ref.dtype)
    c_out_ref[...] = c_new.astype(c_out_ref.dtype)


def lstm_forward(x, hidden, cell, params):
    """x: (B, 1, input_size); hidden/cell: (1, B, H). Returns (log_probs, hidden', cell')."""
    B, S, I = x.shape
    assert S == 1, "module squeezes dim 1 -> seq_len must be 1"
    H = hidden.shape[-1]
    O = params["output_size"]
    Op = params["b_out"].shape[-1]            # lane-padded output dim (multiple of 128)

    TB = 8                                    # batch tile (sublane-aligned)
    Bp = ((B + TB - 1) // TB) * TB

    # Fused gate-matmul LHS: concat([x, h]) once in the wrapper.
    xh = jnp.concatenate([x[:, 0, :], hidden[0]], axis=1)   # (B, I+H)
    c0 = cell[0]                                            # (B, H)
    pad_b = Bp - B
    if pad_b:
        xh = jnp.pad(xh, ((0, pad_b), (0, 0)))
        c0 = jnp.pad(c0, ((0, pad_b), (0, 0)))

    out, h_new, c_new = pl.pallas_call(
        _lstm_kernel,
        out_shape=(
            jax.ShapeDtypeStruct((Bp, Op), jnp.float32),
            jax.ShapeDtypeStruct((Bp, H), jnp.float32),
            jax.ShapeDtypeStruct((Bp, H), jnp.float32),
        ),
        grid=(Bp // TB,),
        in_specs=[
            pl.BlockSpec((TB, I + H), lambda b: (b, 0)),
            pl.BlockSpec((TB, H), lambda b: (b, 0)),
            # Weights/biases: constant index_map -> stay resident across batch tiles.
            pl.BlockSpec((I + H, 4 * H), lambda b: (0, 0)),
            pl.BlockSpec((1, 4 * H), lambda b: (0, 0)),
            pl.BlockSpec((2 * H, Op), lambda b: (0, 0)),
            pl.BlockSpec((1, Op), lambda b: (0, 0)),
        ],
        out_specs=(
            pl.BlockSpec((TB, Op), lambda b: (b, 0)),
            pl.BlockSpec((TB, H), lambda b: (b, 0)),
            pl.BlockSpec((TB, H), lambda b: (b, 0)),
        ),
        compiler_params=pltpu.CompilerParams(
            dimension_semantics=("parallel",)),   # batch tiles shard across TCs (v7x)
    )(xh, c0, params["W_gates"], params["b_gates"], params["W_out"], params["b_out"])

    # Slice padding off before anything downstream (padded rows/lanes hold garbage).
    return out[:B, :O], h_new[:B][None], c_new[:B][None]


def make_params(key, input_size, hidden_size, cell_size, output_size):
    assert cell_size == hidden_size, "nn.LSTM requires cell_size == hidden_size"
    H, I, O = hidden_size, input_size, output_size
    k = jax.random.split(key, 6)
    bound_lstm = 1.0 / jnp.sqrt(H)
    bound_o2o = 1.0 / jnp.sqrt(2 * H + cell_size)
    u = lambda kk, shape, b: jax.random.uniform(kk, shape, jnp.float32, -b, b)

    # PyTorch-layout f32 originals (kept only for the reference check).
    W_ih = u(k[0], (4 * H, I), bound_lstm)
    W_hh = u(k[1], (4 * H, H), bound_lstm)
    b_ih = u(k[2], (4 * H,), bound_lstm)
    b_hh = u(k[3], (4 * H,), bound_lstm)
    W_o2o = u(k[4], (O, 2 * H + cell_size), bound_o2o)
    b_o2o = u(k[5], (O,), bound_o2o)

    # ---- Kernel-ready transforms, all done ONCE at parameter-build time ----
    # 1) Stack input/hidden gate weights -> single (I+H, 4H) matmul operand.
    W_gates = jnp.concatenate([W_ih.T, W_hh.T], axis=0)             # (I+H, 4H)
    b_gates = (b_ih + b_hh)[None, :]                                # (1, 4H) pre-summed
    # 2) Pre-scale i/f/o gate lanes by 0.5 so the kernel needs a single tanh pass
    #    (sigmoid(z) == 0.5*tanh(z/2) + 0.5). Power-of-two scale -> exact in bf16.
    scale = jnp.concatenate([jnp.full((H,), 0.5, jnp.float32),
                             jnp.full((H,), 0.5, jnp.float32),
                             jnp.ones((H,), jnp.float32),
                             jnp.full((H,), 0.5, jnp.float32)])
    W_gates = W_gates * scale[None, :]
    b_gates = b_gates * scale[None, :]
    # 3) Fold the duplicated h in concat([h', h', c']) and stack the output projection:
    #    concat([h',h',c']) @ W_o2o.T == [h'|c'] @ [(W1+W2) ; W3].
    W_o2o_t = W_o2o.T                                               # (2H+C, O)
    W_out = jnp.concatenate([W_o2o_t[:H] + W_o2o_t[H:2 * H], W_o2o_t[2 * H:]], axis=0)
    # 4) Lane-pad the output dim to a 128 multiple once (padded bias lanes -> -1e30 so
    #    they underflow to zero probability inside the kernel's log-softmax).
    Op = ((O + 127) // 128) * 128
    W_out = jnp.pad(W_out, ((0, 0), (0, Op - O)))
    b_out = jnp.pad(b_o2o[None, :], ((0, 0), (0, Op - O)), constant_values=-1e30)

    return {
        # bf16 weights (MXU-native, f32 accumulation in-kernel); biases stay f32.
        "W_gates": W_gates.astype(jnp.bfloat16),
        "b_gates": b_gates,
        "W_out": W_out.astype(jnp.bfloat16),
        "b_out": b_out,
        "output_size": O,
        "ref": {"W_ih": W_ih, "W_hh": W_hh, "b_ih": b_ih, "b_hh": b_hh,
                "W_o2o": W_o2o, "b_o2o": b_o2o},
    }


def _reference(x, hidden, cell, ref):
    """Pure-JAX f32 mirror of the PyTorch module (gate order i, f, g, o)."""
    x2, h, c = x[:, 0, :], hidden[0], cell[0]
    gates = x2 @ ref["W_ih"].T + ref["b_ih"] + h @ ref["W_hh"].T + ref["b_hh"]
    H = h.shape[-1]
    i = jax.nn.sigmoid(gates[:, :H])
    f = jax.nn.sigmoid(gates[:, H:2 * H])
    g = jnp.tanh(gates[:, 2 * H:3 * H])
    o = jax.nn.sigmoid(gates[:, 3 * H:])
    c_new = f * c + i * g
    h_new = o * jnp.tanh(c_new)
    combined = jnp.concatenate([h_new, h_new, c_new], axis=1)
    logits = combined @ ref["W_o2o"].T + ref["b_o2o"]
    return jax.nn.log_softmax(logits, axis=1), h_new[None], c_new[None]


if __name__ == "__main__":
    batch, seq = 2, 1
    input_size, hidden_size, cell_size, output_size = 16, 32, 32, 8

    key = jax.random.PRNGKey(0)
    k_x, k_h, k_c, k_p = jax.random.split(key, 4)
    x = jax.random.normal(k_x, (batch, seq, input_size), jnp.float32)
    # Module's initHidden/initCell return zeros; use non-zero states here so the
    # recurrent (h) and cell (c) paths of the kernel are actually exercised.
    hidden = jax.random.normal(k_h, (1, batch, hidden_size), jnp.float32)
    cell = jax.random.normal(k_c, (1, batch, cell_size), jnp.float32)
    params = make_params(k_p, input_size, hidden_size, cell_size, output_size)

    out, h_new, c_new = lstm_forward(x, hidden, cell, params)
    jax.block_until_ready((out, h_new, c_new))

    ref_out, ref_h, ref_c = _reference(x, hidden, cell, params["ref"])
    assert out.shape == (batch, output_size)
    assert h_new.shape == (1, batch, hidden_size)
    assert c_new.shape == (1, batch, cell_size)
    assert bool(jnp.all(jnp.isfinite(out)))
    # Tolerance covers bf16 weight quantization vs the f32 PyTorch-style reference.
    assert jnp.allclose(out, ref_out, atol=3e-2, rtol=3e-2)
    assert jnp.allclose(h_new, ref_h, atol=3e-2, rtol=3e-2)
    assert jnp.allclose(c_new, ref_c, atol=3e-2, rtol=3e-2)

    print("KERNEL_OK")
</pallas_src>

<mosaic_0001>
module attributes {stable_mosaic.version = 11 : i64} {
  func.func @_lstm_kernel(%arg0: i32, %arg1: memref<8x48xf32, #tpu.memory_space<vmem>>, %arg2: memref<8x32xf32, #tpu.memory_space<vmem>>, %arg3: memref<48x128xbf16, #tpu.memory_space<vmem>>, %arg4: memref<1x128xf32, #tpu.memory_space<vmem>>, %arg5: memref<64x128xbf16, #tpu.memory_space<vmem>>, %arg6: memref<1x128xf32, #tpu.memory_space<vmem>>, %arg7: memref<8x128xf32, #tpu.memory_space<vmem>>, %arg8: memref<8x32xf32, #tpu.memory_space<vmem>>, %arg9: memref<8x32xf32, #tpu.memory_space<vmem>>) attributes {dimension_semantics = [#tpu.dimension_semantics<parallel>], iteration_bounds = array<i64: 1>, scalar_prefetch = 0 : i64, scratch_operands = 0 : i64, tpu.core_type = #tpu.core_type<tc>, window_params = [{transform_indices = @transform_0, window_bounds = array<i64: 8, 48>}, {transform_indices = @transform_1, window_bounds = array<i64: 8, 32>}, {pipeline_mode = #tpu.pipeline_mode<synchronous>, transform_indices = @transform_2, window_bounds = array<i64: 48, 128>}, {pipeline_mode = #tpu.pipeline_mode<synchronous>, transform_indices = @transform_3, window_bounds = array<i64: 1, 128>}, {pipeline_mode = #tpu.pipeline_mode<synchronous>, transform_indices = @transform_4, window_bounds = array<i64: 64, 128>}, {pipeline_mode = #tpu.pipeline_mode<synchronous>, transform_indices = @transform_5, window_bounds = array<i64: 1, 128>}, {transform_indices = @transform_6, window_bounds = array<i64: 8, 128>}, {transform_indices = @transform_7, window_bounds = array<i64: 8, 32>}, {transform_indices = @transform_8, window_bounds = array<i64: 8, 32>}]} {
    %c0 = arith.constant 0 : index
    %c0_0 = arith.constant 0 : index
    %0 = vector.load %arg2[%c0, %c0_0] : memref<8x32xf32, #tpu.memory_space<vmem>>, vector<8x32xf32>
    %c0_1 = arith.constant 0 : index
    %c0_2 = arith.constant 0 : index
    %1 = vector.load %arg1[%c0_1, %c0_2] : memref<8x48xf32, #tpu.memory_space<vmem>>, vector<8x48xf32>
    %2 = arith.truncf %1 : vector<8x48xf32> to vector<8x48xbf16>
    %c0_3 = arith.constant 0 : index
    %c0_4 = arith.constant 0 : index
    %3 = vector.load %arg3[%c0_3, %c0_4] : memref<48x128xbf16, #tpu.memory_space<vmem>>, vector<48x128xbf16>
    %cst = arith.constant dense<0.000000e+00> : vector<8x128xf32>
    %4 = tpu.matmul %2, %3, %cst {dimension_numbers = #tpu.dot_dimension_numbers<[1], [0], [0], [1], [0, 0, 1, 1], [], []>} : vector<8x48xbf16>, vector<48x128xbf16>, vector<8x128xf32> -> vector<8x128xf32>
    %c0_5 = arith.constant 0 : index
    %c0_6 = arith.constant 0 : index
    %5 = vector.load %arg4[%c0_5, %c0_6] : memref<1x128xf32, #tpu.memory_space<vmem>>, vector<1x128xf32>
    %6 = vector.broadcast %5 : vector<1x128xf32> to vector<8x128xf32>
    %7 = arith.addf %4, %6 : vector<8x128xf32>
    %8 = math.tanh %7 : vector<8x128xf32>
    %9 = tpu.iota {dimensions = array<i32: 1>} : vector<8x128xi32>
    %c64_i32 = arith.constant 64 : i32
    %10 = vector.broadcast %c64_i32 : i32 to vector<8x128xi32>
    %11 = arith.cmpi sge, %9, %10 : vector<8x128xi32>
    %c96_i32 = arith.constant 96 : i32
    %12 = vector.broadcast %c96_i32 : i32 to vector<8x128xi32>
    %13 = arith.cmpi slt, %9, %12 : vector<8x128xi32>
    %14 = arith.andi %11, %13 : vector<8x128xi1>
    %cst_7 = arith.constant 5.000000e-01 : f32
    %15 = vector.broadcast %cst_7 : f32 to vector<8x128xf32>
    %16 = arith.mulf %15, %8 : vector<8x128xf32>
    %cst_8 = arith.constant 5.000000e-01 : f32
    %17 = vector.broadcast %cst_8 : f32 to vector<8x128xf32>
    %18 = arith.addf %16, %17 : vector<8x128xf32>
    %19 = arith.select %14, %8, %18 : vector<8x128xi1>, vector<8x128xf32>
    %20 = vector.extract_strided_slice %19 {offsets = [0, 0], sizes = [8, 32], strides = [1, 1]} : vector<8x128xf32> to vector<8x32xf32>
    %21 = vector.extract_strided_slice %19 {offsets = [0, 32], sizes = [8, 32], strides = [1, 1]} : vector<8x128xf32> to vector<8x32xf32>
    %22 = vector.extract_strided_slice %19 {offsets = [0, 64], sizes = [8, 32], strides = [1, 1]} : vector<8x128xf32> to vector<8x32xf32>
    %23 = vector.extract_strided_slice %19 {offsets = [0, 96], sizes = [8, 32], strides = [1, 1]} : vector<8x128xf32> to vector<8x32xf32>
    %24 = arith.mulf %21, %0 : vector<8x32xf32>
    %25 = arith.mulf %20, %22 : vector<8x32xf32>
    %26 = arith.addf %24, %25 : vector<8x32xf32>
    %27 = math.tanh %26 : vector<8x32xf32>
    %28 = arith.mulf %23, %27 : vector<8x32xf32>
    %29 = arith.truncf %28 : vector<8x32xf32> to vector<8x32xbf16>
    %30 = arith.truncf %26 : vector<8x32xf32> to vector<8x32xbf16>
    %c0_9 = arith.constant 0 : index
    %c0_10 = arith.constant 0 : index
    %31 = vector.load %arg5[%c0_9, %c0_10] : memref<64x128xbf16, #tpu.memory_space<vmem>>, vector<32x128xbf16>
    %cst_11 = arith.constant dense<0.000000e+00> : vector<8x128xf32>
    %32 = tpu.matmul %29, %31, %cst_11 {dimension_numbers = #tpu.dot_dimension_numbers<[1], [0], [0], [1], [0, 0, 1, 1], [], []>} : vector<8x32xbf16>, vector<32x128xbf16>, vector<8x128xf32> -> vector<8x128xf32>
    %c32 = arith.constant 32 : index
    %c0_12 = arith.constant 0 : index
    %33 = vector.load %arg5[%c32, %c0_12] : memref<64x128xbf16, #tpu.memory_space<vmem>>, vector<32x128xbf16>
    %cst_13 = arith.constant dense<0.000000e+00> : vector<8x128xf32>
    %34 = tpu.matmul %30, %33, %cst_13 {dimension_numbers = #tpu.dot_dimension_numbers<[1], [0], [0], [1], [0, 0, 1, 1], [], []>} : vector<8x32xbf16>, vector<32x128xbf16>, vector<8x128xf32> -> vector<8x128xf32>
    %35 = arith.addf %32, %34 : vector<8x128xf32>
    %c0_14 = arith.constant 0 : index
    %c0_15 = arith.constant 0 : index
    %36 = vector.load %arg6[%c0_14, %c0_15] : memref<1x128xf32, #tpu.memory_space<vmem>>, vector<1x128xf32>
    %37 = vector.broadcast %36 : vector<1x128xf32> to vector<8x128xf32>
    %38 = arith.addf %35, %37 : vector<8x128xf32>
    %cst_16 = arith.constant dense<0xFF800000> : vector<8xf32>
    %39 = vector.multi_reduction <maximumf>, %38, %cst_16 [1] : vector<8x128xf32> to vector<8xf32>
    %40 = vector.shape_cast %39 : vector<8xf32> to vector<8x1xf32>
    %41 = vector.broadcast %40 : vector<8x1xf32> to vector<8x128xf32>
    %42 = arith.subf %38, %41 : vector<8x128xf32>
    %43 = math.exp %42 : vector<8x128xf32>
    %cst_17 = arith.constant dense<0.000000e+00> : vector<8xf32>
    %44 = vector.multi_reduction <add>, %43, %cst_17 [1] : vector<8x128xf32> to vector<8xf32>
    %45 = vector.shape_cast %44 : vector<8xf32> to vector<8x1xf32>
    %46 = math.log %45 : vector<8x1xf32>
    %47 = vector.broadcast %46 : vector<8x1xf32> to vector<8x128xf32>
    %48 = arith.subf %42, %47 : vector<8x128xf32>
    %c0_18 = arith.constant 0 : index
    %c0_19 = arith.constant 0 : index
    %49 = vector.load %arg7[%c0_18, %c0_19] : memref<8x128xf32, #tpu.memory_space<vmem>>, vector<8x128xf32>
    tpu.vector_store %arg7[%c0_18, %c0_19], %48 {strides = array<i32>} : memref<8x128xf32, #tpu.memory_space<vmem>>, vector<8x128xf32>,
    %c0_20 = arith.constant 0 : index
    %c0_21 = arith.constant 0 : index
    %50 = vector.load %arg8[%c0_20, %c0_21] : memref<8x32xf32, #tpu.memory_space<vmem>>, vector<8x32xf32>
    tpu.vector_store %arg8[%c0_20, %c0_21], %28 {strides = array<i32>} : memref<8x32xf32, #tpu.memory_space<vmem>>, vector<8x32xf32>,
    %c0_22 = arith.constant 0 : index
    %c0_23 = arith.constant 0 : index
    %51 = vector.load %arg9[%c0_22, %c0_23] : memref<8x32xf32, #tpu.memory_space<vmem>>, vector<8x32xf32>
    tpu.vector_store %arg9[%c0_22, %c0_23], %26 {strides = array<i32>} : memref<8x32xf32, #tpu.memory_space<vmem>>, vector<8x32xf32>,
    return
  }
  func.func @transform_0(%arg0: i32) -> (i32, i32) {
    %c0_i32 = arith.constant 0 : i32
    %c0_i32_0 = arith.constant 0 : i32
    return %arg0, %c0_i32 : i32, i32
  }
  func.func @transform_1(%arg0: i32) -> (i32, i32) {
    %c0_i32 = arith.constant 0 : i32
    %c0_i32_0 = arith.constant 0 : i32
    return %arg0, %c0_i32 : i32, i32
  }
  func.func @transform_2(%arg0: i32) -> (i32, i32) {
    %c0_i32 = arith.constant 0 : i32
    %c0_i32_0 = arith.constant 0 : i32
    %c0_i32_1 = arith.constant 0 : i32
    return %c0_i32, %c0_i32_0 : i32, i32
  }
  func.func @transform_3(%arg0: i32) -> (i32, i32) {
    %c0_i32 = arith.constant 0 : i32
    %c0_i32_0 = arith.constant 0 : i32
    %c0_i32_1 = arith.constant 0 : i32
    return %c0_i32, %c0_i32_0 : i32, i32
  }
  func.func @transform_4(%arg0: i32) -> (i32, i32) {
    %c0_i32 = arith.constant 0 : i32
    %c0_i32_0 = arith.constant 0 : i32
    %c0_i32_1 = arith.constant 0 : i32
    return %c0_i32, %c0_i32_0 : i32, i32
  }
  func.func @transform_5(%arg0: i32) -> (i32, i32) {
    %c0_i32 = arith.constant 0 : i32
    %c0_i32_0 = arith.constant 0 : i32
    %c0_i32_1 = arith.constant 0 : i32
    return %c0_i32, %c0_i32_0 : i32, i32
  }
  func.func @transform_6(%arg0: i32) -> (i32, i32) {
    %c0_i32 = arith.constant 0 : i32
    %c0_i32_0 = arith.constant 0 : i32
    return %arg0, %c0_i32 : i32, i32
  }
  func.func @transform_7(%arg0: i32) -> (i32, i32) {
    %c0_i32 = arith.constant 0 : i32
    %c0_i32_0 = arith.constant 0 : i32
    return %arg0, %c0_i32 : i32, i32
  }
  func.func @transform_8(%arg0: i32) -> (i32, i32) {
    %c0_i32 = arith.constant 0 : i32
    %c0_i32_0 = arith.constant 0 : i32
    return %arg0, %c0_i32 : i32, i32
  }
}

</mosaic_0001>

<llo_original>
// kernel: tpu_custom_call.1
$region0: #{tpu_custom_call.1}
  #allocation0 [shape = 'u32[]', space=smem, size = 0x4, offset = 0x4, fixed_abs, tag = 'smem constant byte address 0x4 - core index']
  #allocation1 [shape = 'u32[144,128]{1,0:T(1,128)}', space=vmem, size = 0x12000, scoped, tag = 'internal scratch']
  %s0 = inlined_call_operand.hbm [shape: f32[8,48], index: 0, kind: input, shape index: {}]
  %s1 = inlined_call_operand.hbm [shape: f32[8,32], index: 1, kind: input, shape index: {}]
  %s2 = inlined_call_operand.hbm [shape: bf16[48,128], index: 2, kind: input, shape index: {}]
  %s3 = inlined_call_operand.vmem [shape: f32[1,128], index: 3, kind: input, shape index: {}]
  %s4 = inlined_call_operand.hbm [shape: bf16[64,128], index: 4, kind: input, shape index: {}]
  %s5 = inlined_call_operand.vmem [shape: f32[1,128], index: 5, kind: input, shape index: {}]
  %s6 = inlined_call_operand.hbm [shape: f32[8,128], index: 6, kind: output, shape index: {0}]
  %s7 = inlined_call_operand.hbm [shape: f32[8,32], index: 7, kind: output, shape index: {1}]
  %s8 = inlined_call_operand.hbm [shape: f32[8,32], index: 8, kind: output, shape index: {2}]
  %9 = xla_tuple %s6, %s7, %s8
  %s10 = sld [smem:[#allocation0]]
  $region66: #{tpu_custom_call.1} parent=0
    _
  %s12 = ssub.s32 1, %s10
  %s13 = scalar_select 0, %s12, %s10
  $region1: #{tpu_custom_call.1} parent=0
    #allocation2 [shape = 'u8[4096]{0}', space=vmem, size = 0x1000, scoped, tag = 'input window, operand 0, single buffered']
    #allocation3 [shape = 's32[1]{0}', space=sflag, size = 0x4, scoped, tag = 'scoped memory for tpu_custom_call.1']
    #allocation4 [shape = 's32[1]{0}', space=sflag, size = 0x4, scoped, tag = 'scoped memory for tpu_custom_call.1']
    #allocation5 [shape = 'u8[4096]{0}', space=vmem, size = 0x1000, scoped, tag = 'input window, operand 1, single buffered']
    #allocation6 [shape = 's32[1]{0}', space=sflag, size = 0x4, scoped, tag = 'scoped memory for tpu_custom_call.1']
    #allocation7 [shape = 'u8[12288]{0}', space=vmem, size = 0x3000, scoped, tag = 'input window, operand 2, single buffered']
    #allocation8 [shape = 'u8[16384]{0}', space=vmem, size = 0x4000, scoped, tag = 'input window, operand 4, single buffered']
    #allocation9 [shape = 's32[1]{0}', space=sflag, size = 0x4, scoped, tag = 'scoped memory for tpu_custom_call.1']
    #allocation10 [shape = 'u8[4096]{0}', space=vmem, size = 0x1000, scoped, tag = 'output window, operand 0, single buffered']
    #allocation11 [shape = 'u8[4096]{0}', space=vmem, size = 0x1000, scoped, tag = 'output window, operand 1, single buffered']
    #allocation12 [shape = 's32[1]{0}', space=sflag, size = 0x4, scoped, tag = 'scoped memory for tpu_custom_call.1']
    #allocation13 [shape = 'u8[4096]{0}', space=vmem, size = 0x1000, scoped, tag = 'output window, operand 2, single buffered']
    %14 = vsyncpa [#allocation3], 0
    %15 = vsyncpa [#allocation6], 0
    %16 = vsyncpa [#allocation9], 0
    %17 = vsyncpa [#allocation4], 0
    %18 = vsyncpa [#allocation12], 0
    // Predicated region
    $region2: #{tpu_custom_call.1} parent=1 // pred_check
      _
    $region3: #{tpu_custom_call.1} parent=1 // pred_check_branch
      %20 = sbr.rel (0) target = $region5
    $region4: #{tpu_custom_call.1} parent=1 // pred_region
      %s22 = ssub.s32 128, 128
      %23 = vsyncadd [#allocation3], %s22
      %s25 = sshll.u32 [#allocation2], 4
      %s26 = int_to_ptr.vmem [resolvable:$true] %s25
      %28 = dma.hbm_to_vmem [thread:$0]  %s0, 128, %s26, [#allocation3]
    $region5: #{tpu_custom_call.1} parent=1 // pred_fallthru
      _
    // Predicated region
    $region6: #{tpu_custom_call.1} parent=1 // pred_check
      _
    $region7: #{tpu_custom_call.1} parent=1 // pred_check_branch
      %30 = sbr.rel (0) target = $region9
    $region8: #{tpu_custom_call.1} parent=1 // pred_region
      %s32 = ssub.s32 128, 128
      %33 = vsyncadd [#allocation6], %s32
      %s35 = sshll.u32 [#allocation5], 4
      %s36 = int_to_ptr.vmem [resolvable:$true] %s35
      %38 = dma.hbm_to_vmem [thread:$0]  %s1, 128, %s36, [#allocation6]
    $region9: #{tpu_custom_call.1} parent=1 // pred_fallthru
      _
    // Predicated region
    $region10: #{tpu_custom_call.1} parent=1 // pred_check
      _
    $region11: #{tpu_custom_call.1} parent=1 // pred_check_branch
      %40 = sbr.rel (0) target = $region13
    $region12: #{tpu_custom_call.1} parent=1 // pred_region
      %s42 = ssub.s32 384, 384
      %43 = vsyncadd [#allocation6], %s42
      %s44 = sshll.u32 [#allocation7], 4
      %s45 = int_to_ptr.vmem [resolvable:$true] %s44
      %50 = dma.hbm_to_vmem [thread:$0]  %s2, 384, %s45, [#allocation6], 64, 64, 4
    $region13: #{tpu_custom_call.1} parent=1 // pred_fallthru
      _
    // Predicated region
    $region14: #{tpu_custom_call.1} parent=1 // pred_check
      _
    $region15: #{tpu_custom_call.1} parent=1 // pred_check_branch
      %52 = sbr.rel (0) target = $region17
    $region16: #{tpu_custom_call.1} parent=1 // pred_region
      _
    $region17: #{tpu_custom_call.1} parent=1 // pred_fallthru
      _
    // Predicated region
    $region18: #{tpu_custom_call.1} parent=1 // pred_check
      _
    $region19: #{tpu_custom_call.1} parent=1 // pred_check_branch
      %54 = sbr.rel (0) target = $region21
    $region20: #{tpu_custom_call.1} parent=1 // pred_region
      %s56 = ssub.s32 512, 512
      %57 = vsyncadd [#allocation9], %s56
      %s58 = sshll.u32 [#allocation8], 4
      %s59 = int_to_ptr.vmem [resolvable:$true] %s58
      %64 = dma.hbm_to_vmem [thread:$0]  %s4, 512, %s59, [#allocation9], 64, 64, 4
    $region21: #{tpu_custom_call.1} parent=1 // pred_fallthru
      _
    // Predicated region
    $region22: #{tpu_custom_call.1} parent=1 // pred_check
      _
    $region23: #{tpu_custom_call.1} parent=1 // pred_check_branch
      %66 = sbr.rel (0) target = $region25
    $region24: #{tpu_custom_call.1} parent=1 // pred_region
      _
    $region25: #{tpu_custom_call.1} parent=1 // pred_fallthru
      _
    // Predicated region
    $region26: #{tpu_custom_call.1} parent=1 // pred_check
      _
    $region27: #{tpu_custom_call.1} parent=1 // pred_check_branch
      %68 = sbr.rel (0) target = $region29
    $region28: #{tpu_custom_call.1} parent=1 // pred_region
      %69 = dma.done [#allocation3], 128
    $region29: #{tpu_custom_call.1} parent=1 // pred_fallthru
      _
    // Predicated region
    $region30: #{tpu_custom_call.1} parent=1 // pred_check
      _
    $region31: #{tpu_custom_call.1} parent=1 // pred_check_branch
      %71 = sbr.rel (0) target = $region33
    $region32: #{tpu_custom_call.1} parent=1 // pred_region
      %72 = dma.done [#allocation6], 128
    $region33: #{tpu_custom_call.1} parent=1 // pred_fallthru
      _
    // Predicated region
    $region34: #{tpu_custom_call.1} parent=1 // pred_check
      _
    $region35: #{tpu_custom_call.1} parent=1 // pred_check_branch
      %74 = sbr.rel (0) target = $region37
    $region36: #{tpu_custom_call.1} parent=1 // pred_region
      %75 = dma.done [#allocation6], 384
    $region37: #{tpu_custom_call.1} parent=1 // pred_fallthru
      _
    // Predicated region
    $region38: #{tpu_custom_call.1} parent=1 // pred_check
      _
    $region39: #{tpu_custom_call.1} parent=1 // pred_check_branch
      %77 = sbr.rel (0) target = $region41
    $region40: #{tpu_custom_call.1} parent=1 // pred_region
      %78 = dma.done [#allocation9], 512
    $region41: #{tpu_custom_call.1} parent=1 // pred_fallthru
      _
    %v80 = vld [vmem:[#allocation5] sm:$0xff]
    %v81 = vld [vmem:[#allocation2] sm:$0xff]
    %v82 = vpack.c.bf16 %v81, %v81
    %v83 = vld [vmem:[#allocation7] sm:$0xf]
    %v84 = vld [vmem:[#allocation7 + $0x4] sm:$0xf]
    %v85 = vld [vmem:[#allocation7 + $0x8] sm:$0xf]
    %v86 = vld [vmem:[#allocation7 + $0xc] sm:$0xf]
    %v87 = vld [vmem:[#allocation7 + $0x10] sm:$0xf]
    %v88 = vld [vmem:[#allocation7 + $0x14] sm:$0xf]
    %v89 = vld [vmem:[%s3] sm:$0x1]
    %v91 = vlaneseq
    %v92 = vshrl.u32 %v91, 7
    %v93 = vsub.s32 0, %v92
    %v94 = vrot.slane %v89, %v93
    %v102 = vunpack.c.l.b16 %v83
    %v103 = vunpack.c.l.b16 %v84
    %v104 = vunpack.c.l.b16 %v85
    %v105 = vunpack.c.l.b16 %v86
    %v106 = vunpack.c.l.b16 %v87
    %v107 = vunpack.c.l.b16 %v88
    %v108 = vpack.c.b16 %v103, %v102
    %v109 = vpack.c.b16 %v105, %v104
    %v110 = vpack.c.b16 %v107, %v106
    %vm114 = vcmask 392192
    %v116 = vsel %vm114, %v82, 0
    %118 = vmatprep.subr.bf16.mxu0 0
    %119 = vmatpush1.bf16.msra.mxu0 0
    %120 = vmatprep.subr.bf16.mxu0 0
    %121 = vmatpush1.bf16.msra.mxu0 0
    %122 = vmatprep.subr.bf16.mxu0 0
    %123 = vmatpush1.bf16.msra.mxu0 0
    %124 = vmatprep.subr.bf16.mxu0 0
    %125 = vmatpush1.bf16.msra.mxu0 0
    %126 = vmatprep.subr.bf16.mxu0 0
    %127 = vmatpush1.bf16.msra.mxu0 0
    %128 = vmatprep.subr.bf16.mxu0 0
    %129 = vmatpush1.bf16.msra.mxu0 %v110
    %130 = vmatprep.subr.bf16.mxu0 0
    %131 = vmatpush1.bf16.msra.mxu0 %v109
    %132 = vmatprep.subr.bf16.mxu0 0
    %133 = vmatpush1.bf16.msra.mxu0 %v108
    %134 = vmatprep.subr.bf16.mxu0 0
    %135 = vmatpush2.bf16.msra.mxu0 0
    %136 = vmatprep.subr.bf16.mxu0 0
    %137 = vmatpush2.bf16.msra.mxu0 0
    %138 = vmatprep.subr.bf16.mxu0 0
    %139 = vmatpush2.bf16.msra.mxu0 0
    %140 = vmatprep.subr.bf16.mxu0 0
    %141 = vmatpush2.bf16.msra.mxu0 0
    %142 = vmatprep.subr.bf16.mxu0 0
    %143 = vmatpush2.bf16.msra.mxu0 0
    %144 = vmatprep.subr.bf16.mxu0 0
    %145 = vmatpush2.bf16.msra.mxu0 0
    %146 = vmatprep.subr.bf16.mxu0 0
    %147 = vmatpush2.bf16.msra.mxu0 0
    %148 = vmatprep.subr.bf16.mxu0 0
    %149 = vmatpush2.bf16.msra.mxu0 0
    %150 = vmatprep.mubr.bf16.mxu0 0
    %151 = vmatmul.mubr.bf16.gmra.mxu0 %v116
    %v152 = vpop.f32.mrf.mxu0
    %v153 = vadd.f32 %v94, %v152
    %v154 = vpop.f32.mrf.mxu0
    %v155 = vpop.f32.mrf.mxu0
    %v156 = vpop.f32.mrf.mxu0
    %157 = vdwg.mxu0
    %v158 = vtanh.pop %v153
    %v159 = vlaneseq
    %v160 = vand.u32 %v159, 127
    %vm161 = vcmp.ge.s32.totalorder %v160, 64
    %vm162 = vcmp.lt.s32.totalorder %v160, 96
    %vm163 = vmand %vm161, %vm162
    %v164 = vmul.f32 %v158, 0.5
    %v165 = vadd.f32 %v164, 0.5
    %v166 = vsel %vm163, %v158, %v165
    %168 = vrot.lane.b32.xlu0 %v80, 32
    %v169 = vpop.permute.xlu0 %168
    %v171 = vmul.f32 %v166, %v169
    %173 = vrot.lane.b32.xlu0 %v166, 64
    %v174 = vpop.permute.xlu0 %173
    %v176 = vmul.f32 %v166, %v174
    %178 = vrot.lane.b32.xlu0 %v176, 32
    %v179 = vpop.permute.xlu0 %178
    %v181 = vadd.f32 %v171, %v179
    %v182 = vtanh.pop %v181
    %184 = vrot.lane.b32.xlu0 %v182, 64
    %v185 = vpop.permute.xlu0 %184
    %v187 = vmul.f32 %v166, %v185
    %v188 = vpack.c.bf16 %v187, %v187
    %v189 = vpack.c.bf16 %v181, %v181
    %v190 = vld [vmem:[#allocation8] sm:$0xf]
    %v191 = vld [vmem:[#allocation8 + $0x4] sm:$0xf]
    %v192 = vld [vmem:[#allocation8 + $0x8] sm:$0xf]
    %v193 = vld [vmem:[#allocation8 + $0xc] sm:$0xf]
    %v194 = vld [vmem:[#allocation8 + $0x10] sm:$0xf]
    %v195 = vld [vmem:[#allocation8 + $0x14] sm:$0xf]
    %v196 = vld [vmem:[#allocation8 + $0x18] sm:$0xf]
    %v197 = vld [vmem:[#allocation8 + $0x1c] sm:$0xf]
    %199 = vrot.lane.b32.xlu0 %v189, 96
    %v200 = vpop.permute.xlu0 %199
    %v205 = vunpack.c.l.b16 %v194
    %v206 = vunpack.c.l.b16 %v195
    %v207 = vunpack.c.l.b16 %v196
    %v208 = vunpack.c.l.b16 %v197
    %v209 = vpack.c.b16 %v206, %v205
    %v210 = vpack.c.b16 %v208, %v207
    %vm213 = vcmask 261120
    %v215 = vsel %vm213, %v200, 0
    %217 = vmatprep.subr.bf16.mxu0 0
    %218 = vmatpush1.bf16.msra.mxu0 0
    %219 = vmatprep.subr.bf16.mxu0 0
    %220 = vmatpush1.bf16.msra.mxu0 0
    %221 = vmatprep.subr.bf16.mxu0 0
    %222 = vmatpush1.bf16.msra.mxu0 0
    %223 = vmatprep.subr.bf16.mxu0 0
    %224 = vmatpush1.bf16.msra.mxu0 0
    %225 = vmatprep.subr.bf16.mxu0 0
    %226 = vmatpush1.bf16.msra.mxu0 0
    %227 = vmatprep.subr.bf16.mxu0 0
    %228 = vmatpush1.bf16.msra.mxu0 0
    %229 = vmatprep.subr.bf16.mxu0 0
    %230 = vmatpush1.bf16.msra.mxu0 %v210
    %231 = vmatprep.subr.bf16.mxu0 0
    %232 = vmatpush1.bf16.msra.mxu0 %v209
    %233 = vmatprep.subr.bf16.mxu0 0
    %234 = vmatpush2.bf16.msra.mxu0 0
    %235 = vmatprep.subr.bf16.mxu0 0
    %236 = vmatpush2.bf16.msra.mxu0 0
    %237 = vmatprep.subr.bf16.mxu0 0
    %238 = vmatpush2.bf16.msra.mxu0 0
    %239 = vmatprep.subr.bf16.mxu0 0
    %240 = vmatpush2.bf16.msra.mxu0 0
    %241 = vmatprep.subr.bf16.mxu0 0
    %242 = vmatpush2.bf16.msra.mxu0 0
    %243 = vmatprep.subr.bf16.mxu0 0
    %244 = vmatpush2.bf16.msra.mxu0 0
    %245 = vmatprep.subr.bf16.mxu0 0
    %246 = vmatpush2.bf16.msra.mxu0 0
    %247 = vmatprep.subr.bf16.mxu0 0
    %248 = vmatpush2.bf16.msra.mxu0 0
    %249 = vmatprep.mubr.bf16.mxu0 0
    %250 = vmatmul.mubr.bf16.gmra.mxu0 %v215
    %v251 = vpop.f32.mrf.mxu0
    %v252 = vadd.f32 0.0, %v251
    %v253 = vpop.f32.mrf.mxu0
    %v254 = vpop.f32.mrf.mxu0
    %v255 = vpop.f32.mrf.mxu0
    %256 = vdwg.mxu0
    %258 = vrot.lane.b32.xlu0 %v188, 32
    %v259 = vpop.permute.xlu0 %258
    %v264 = vunpack.c.l.b16 %v190
    %v265 = vunpack.c.l.b16 %v191
    %v266 = vunpack.c.l.b16 %v192
    %v267 = vunpack.c.l.b16 %v193
    %v268 = vpack.c.b16 %v265, %v264
    %v269 = vpack.c.b16 %v267, %v266
    %v273 = vsel %vm213, %v259, 0
    %275 = vmatprep.subr.bf16.mxu0 0
    %276 = vmatpush1.bf16.msra.mxu0 0
    %277 = vmatprep.subr.bf16.mxu0 0
    %278 = vmatpush1.bf16.msra.mxu0 0
    %279 = vmatprep.subr.bf16.mxu0 0
    %280 = vmatpush1.bf16.msra.mxu0 0
    %281 = vmatprep.subr.bf16.mxu0 0
    %282 = vmatpush1.bf16.msra.mxu0 0
    %283 = vmatprep.subr.bf16.mxu0 0
    %284 = vmatpush1.bf16.msra.mxu0 0
    %285 = vmatprep.subr.bf16.mxu0 0
    %286 = vmatpush1.bf16.msra.mxu0 0
    %287 = vmatprep.subr.bf16.mxu0 0
    %288 = vmatpush1.bf16.msra.mxu0 %v269
    %289 = vmatprep.subr.bf16.mxu0 0
    %290 = vmatpush1.bf16.msra.mxu0 %v268
    %291 = vmatprep.subr.bf16.mxu0 0
    %292 = vmatpush2.bf16.msra.mxu0 0
    %293 = vmatprep.subr.bf16.mxu0 0
    %294 = vmatpush2.bf16.msra.mxu0 0
    %295 = vmatprep.subr.bf16.mxu0 0
    %296 = vmatpush2.bf16.msra.mxu0 0
    %297 = vmatprep.subr.bf16.mxu0 0
    %298 = vmatpush2.bf16.msra.mxu0 0
    %299 = vmatprep.subr.bf16.mxu0 0
    %300 = vmatpush2.bf16.msra.mxu0 0
    %301 = vmatprep.subr.bf16.mxu0 0
    %302 = vmatpush2.bf16.msra.mxu0 0
    %303 = vmatprep.subr.bf16.mxu0 0
    %304 = vmatpush2.bf16.msra.mxu0 0
    %305 = vmatprep.subr.bf16.mxu0 0
    %306 = vmatpush2.bf16.msra.mxu0 0
    %307 = vmatprep.mubr.bf16.mxu0 0
    %308 = vmatmul.mubr.bf16.gmra.mxu0 %v273
    %v309 = vpop.f32.mrf.mxu0
    %v310 = vadd.f32 %v252, %v309
    %v311 = vpop.f32.mrf.mxu0
    %v312 = vpop.f32.mrf.mxu0
    %v313 = vpop.f32.mrf.mxu0
    %314 = vdwg.mxu0
    %v315 = vld [vmem:[%s5] sm:$0x1]
    %v317 = vlaneseq
    %v318 = vshrl.u32 %v317, 7
    %v319 = vsub.s32 0, %v318
    %v320 = vrot.slane %v315, %v319
    %v322 = vadd.f32 %v310, %v320
    %323 = vmax.xlane.f32.xlu0 %v322
    %v324 = vpop.xlane.xlu0 %323
    %v325 = vsub.f32 %v322, %v324
    %v326 = vmul.f32 %v325, 1.442695
    %v327 = vpow.pop %v326
    %328 = vadd.xlane.f32.xlu0 %v327
    %v329 = vpop.xlane.xlu0 %328
    %v330 = vlog2.pop %v329
    %v331 = vmul.f32 %v330, 0.6931472
    %v332 = vsub.f32 %v325, %v331
    %333 = vst [vmem:[#allocation10] sm:$0xff] %v332
    %335 = vrot.lane.b32.xlu0 %v187, 32
    %v336 = vpop.permute.xlu0 %335
    %338 = vst.msk [vmem:[#allocation11] sm:$0xff] %vm213, %v336
    %340 = vrot.lane.b32.xlu0 %v181, 96
    %v341 = vpop.permute.xlu0 %340
    %343 = vst.msk [vmem:[#allocation13] sm:$0xff] %vm213, %v341
    // Predicated region
    $region42: #{tpu_custom_call.1} parent=1 // pred_check
      _
    $region43: #{tpu_custom_call.1} parent=1 // pred_check_branch
      %345 = sbr.rel (0) target = $region45
    $region44: #{tpu_custom_call.1} parent=1 // pred_region
      %s347 = ssub.s32 128, 128
      %348 = vsyncadd [#allocation4], %s347
      %s350 = sshll.u32 [#allocation10], 4
      %s351 = int_to_ptr.vmem [resolvable:$true] %s350
      %353 = dma.vmem_to_hbm [thread:$0]  %s351, 128, %s6, [#allocation4]
    $region45: #{tpu_custom_call.1} parent=1 // pred_fallthru
      _
    // Predicated region
    $region46: #{tpu_custom_call.1} parent=1 // pred_check
      _
    $region47: #{tpu_custom_call.1} parent=1 // pred_check_branch
      %355 = sbr.rel (0) target = $region49
    $region48: #{tpu_custom_call.1} parent=1 // pred_region
      %s357 = ssub.s32 128, 128
      %358 = vsyncadd [#allocation12], %s357
      %s360 = sshll.u32 [#allocation11], 4
      %s361 = int_to_ptr.vmem [resolvable:$true] %s360
      %363 = dma.vmem_to_hbm [thread:$0]  %s361, 128, %s7, [#allocation12]
    $region49: #{tpu_custom_call.1} parent=1 // pred_fallthru
      _
    // Predicated region
    $region50: #{tpu_custom_call.1} parent=1 // pred_check
      _
    $region51: #{tpu_custom_call.1} parent=1 // pred_check_branch
      %365 = sbr.rel (0) target = $region53
    $region52: #{tpu_custom_call.1} parent=1 // pred_region
      %s367 = ssub.s32 128, 128
      %368 = vsyncadd [#allocation12], %s367
      %s370 = sshll.u32 [#allocation13], 4
      %s371 = int_to_ptr.vmem [resolvable:$true] %s370
      %373 = dma.vmem_to_hbm [thread:$0]  %s371, 128, %s8, [#allocation12]
    $region53: #{tpu_custom_call.1} parent=1 // pred_fallthru
      _
    // Predicated region
    $region54: #{tpu_custom_call.1} parent=1 // pred_check
      _
    $region55: #{tpu_custom_call.1} parent=1 // pred_check_branch
      %375 = sbr.rel (0) target = $region57
    $region56: #{tpu_custom_call.1} parent=1 // pred_region
      %376 = dma.done [#allocation4], 128
    $region57: #{tpu_custom_call.1} parent=1 // pred_fallthru
      _
    // Predicated region
    $region58: #{tpu_custom_call.1} parent=1 // pred_check
      _
    $region59: #{tpu_custom_call.1} parent=1 // pred_check_branch
      %378 = sbr.rel (0) target = $region61
    $region60: #{tpu_custom_call.1} parent=1 // pred_region
      %379 = dma.done [#allocation12], 128
    $region61: #{tpu_custom_call.1} parent=1 // pred_fallthru
      _
    // Predicated region
    $region62: #{tpu_custom_call.1} parent=1 // pred_check
      _
    $region63: #{tpu_custom_call.1} parent=1 // pred_check_branch
      %381 = sbr.rel (0) target = $region65
    $region64: #{tpu_custom_call.1} parent=1 // pred_region
      %382 = dma.done [#allocation12], 128
    $region65: #{tpu_custom_call.1} parent=1 // pred_fallthru
      _
    %383 = vsyncpa [#allocation3], 1
    %384 = vsyncpa [#allocation6], 1
    %385 = vsyncpa [#allocation9], 1
    %386 = vsyncpa [#allocation4], 1
    %387 = vsyncpa [#allocation12], 1

</llo_original>
